<compile_context>
chip_gen: v7x
topology: tpu7x:2x2x1
jax: 0.10.0
libtpu: 0.0.40
codegen_flags: <defaults>
</compile_context>

<pallas_src>
import numpy as np

import jax
import jax.numpy as jnp
from jax.experimental import pallas as pl
from jax.experimental.pallas import tpu as pltpu

_BATCH_TILE = 2048  # rows per grid step for large batches (~5 MB peak VMEM)


def _round_up(x, m):
    return (x + m - 1) // m * m


def _cdiv(a, b):
    return -(-a // b)


def _fused_kernel(x_ref, w1_ref, b1_ref, w2_ref, b2_ref, w3_ref, b3_ref, o_ref):
    """Whole DigitsConvNet forward for one batch tile (all weights resident)."""
    x = x_ref[...]                                                       # (TB, 64)

    # conv1 (pre-lowered to matmul) fused with the 2x2 max-pool: four
    # (64 -> 128) dots against the parity-grouped weight columns with a
    # running max.  b1 is identical across the four parity blocks and ReLU is
    # monotone, so max -> +bias -> ReLU is exact, and the (TB, 512)
    # intermediate is never materialized.
    m = jnp.dot(x, w1_ref[:, 0:128], preferred_element_type=jnp.float32)
    for p in range(1, 4):
        m = jnp.maximum(
            m,
            jnp.dot(x, w1_ref[:, p * 128:(p + 1) * 128],
                    preferred_element_type=jnp.float32))
    pooled = jnp.maximum(m + b1_ref[...], 0.0)                           # (TB, 128)

    # conv2 on the 3x3 map has a 1x1 output -> dense (72 -> 4) + bias + ReLU.
    h2 = jnp.dot(pooled, w2_ref[...], preferred_element_type=jnp.float32) + b2_ref[...]
    h2 = jnp.maximum(h2, 0.0)                                            # (TB, 128)

    # fc: Linear(4, 10), packed into 16 output lanes (extra lanes exactly 0).
    y = jnp.dot(h2, w3_ref[...], preferred_element_type=jnp.float32) + b3_ref[...]
    o_ref[...] = y.astype(o_ref.dtype)                                   # (TB, 16)


def prepare_params(params):
    """One-time repack of PyTorch-layout params into kernel layouts (NOT per call)."""
    w1, b1, w2, b2, wfc, bfc = (np.asarray(p, np.float32) for p in params)

    # conv1 -> (64, 512) im2col-style matrix.  Output lane layout:
    #   lane = parity*128 + co*9 + pi*3 + pj, parity = (i%2)*2 + (j%2),
    #   where (i, j) = (2*pi + i%2, 2*pj + j%2) is the conv1 output position.
    w1m = np.zeros((64, 512), np.float32)
    for co in range(8):
        for i in range(6):
            for j in range(6):
                c = ((i % 2) * 2 + (j % 2)) * 128 + co * 9 + (i // 2) * 3 + (j // 2)
                for di in range(3):
                    for dj in range(3):
                        w1m[(i + di) * 8 + (j + dj), c] = w1[co, 0, di, dj]

    # conv1 bias, shared across the four parity blocks -> only 128 lanes needed.
    b1v = np.zeros((128,), np.float32)
    for co in range(8):
        b1v[co * 9: co * 9 + 9] = b1[co]

    # conv2 (3x3 kernel on a 3x3 map -> 1x1 output) == dense (72 -> 4); pad to 128.
    w2m = np.zeros((128, 128), np.float32)
    b2v = np.zeros((128,), np.float32)
    for co in range(4):
        for ci in range(8):
            for di in range(3):
                for dj in range(3):
                    w2m[ci * 9 + di * 3 + dj, co] = w2[co, ci, di, dj]
    b2v[:4] = b2

    # fc (4 -> 10), packed into 16 lanes so the kernel output is (TB, 16).
    w3m = np.zeros((128, 16), np.float32)
    w3m[:4, :10] = wfc.T
    b3v = np.zeros((16,), np.float32)
    b3v[:10] = bfc

    return (jnp.asarray(w1m), jnp.asarray(b1v)[None, :],
            jnp.asarray(w2m), jnp.asarray(b2v)[None, :],
            jnp.asarray(w3m), jnp.asarray(b3v)[None, :])


@jax.jit
def digits_convnet_forward(x, prepared):
    """DigitsConvNet.forward.  x: (N, 8, 8) float32 -> (N, 10) float32."""
    w1m, b1v, w2m, b2v, w3m, b3v = prepared
    N = x.shape[0]
    xf = x.reshape(N, 64).astype(jnp.float32)   # the .view() in the module

    if N <= 64:
        # Tiny batch: one fully padded block (pad is a few hundred bytes, and it
        # guarantees no partial blocks at all on this path).
        tb = _round_up(max(N, 1), 8)
        nb = 1
        rows = tb
        xin = xf if rows == N else jnp.zeros((rows, 64), jnp.float32).at[:N].set(xf)
    else:
        # Aim for >= 2 batch tiles (v7x megacore) with tb <= _BATCH_TILE.  No
        # input padding copy: the partial final block is masked by Pallas and
        # its garbage rows (row-independent compute) are dropped by [:N].
        tb = min(_BATCH_TILE, _round_up(_cdiv(N, 2), 8))
        nb = _cdiv(N, tb)
        rows = N
        xin = xf

    out = pl.pallas_call(
        _fused_kernel,
        out_shape=jax.ShapeDtypeStruct((rows, 16), jnp.float32),
        grid=(nb,),
        in_specs=[
            pl.BlockSpec((tb, 64), lambda i: (i, 0)),      # x batch tile
            pl.BlockSpec((64, 512), lambda i: (0, 0)),     # conv1 matrix (resident)
            pl.BlockSpec((1, 128), lambda i: (0, 0)),      # conv1 bias (per parity)
            pl.BlockSpec((128, 128), lambda i: (0, 0)),    # conv2 matrix
            pl.BlockSpec((1, 128), lambda i: (0, 0)),      # conv2 bias
            pl.BlockSpec((128, 16), lambda i: (0, 0)),     # fc matrix (16 lanes)
            pl.BlockSpec((1, 16), lambda i: (0, 0)),       # fc bias
        ],
        out_specs=pl.BlockSpec((tb, 16), lambda i: (i, 0)),
        compiler_params=pltpu.CompilerParams(
            dimension_semantics=("parallel",),  # batch axis only; no vmem override needed
        ),
    )(xin, w1m, b1v, w2m, b2v, w3m, b3v)

    return out[:N, :10]


def init_params(key):
    """nn.Conv2d / nn.Linear default init (uniform +-1/sqrt(fan_in))."""
    ks = jax.random.split(key, 6)

    def u(k, shape, fan_in):
        bound = 1.0 / np.sqrt(fan_in)
        return jax.random.uniform(k, shape, jnp.float32, -bound, bound)

    w1 = u(ks[0], (8, 1, 3, 3), 9)
    b1 = u(ks[1], (8,), 9)
    w2 = u(ks[2], (4, 8, 3, 3), 72)
    b2 = u(ks[3], (4,), 72)
    wfc = u(ks[4], (10, 4), 4)
    bfc = u(ks[5], (10,), 4)
    return (w1, b1, w2, b2, wfc, bfc)


def digits_convnet_reference(x, params):
    """Plain-JAX reference matching the PyTorch module exactly."""
    w1, b1, w2, b2, wfc, bfc = params
    hp = jax.lax.Precision.HIGHEST
    xb = x[:, None, :, :].astype(jnp.float32)                           # (N,1,8,8)
    h = jax.lax.conv_general_dilated(
        xb, w1, (1, 1), "VALID",
        dimension_numbers=("NCHW", "OIHW", "NCHW"), precision=hp)
    h = jax.nn.relu(h + b1[None, :, None, None])                        # (N,8,6,6)
    h = jax.lax.reduce_window(h, -jnp.inf, jax.lax.max,
                              (1, 1, 2, 2), (1, 1, 2, 2), "VALID")      # (N,8,3,3)
    h = jax.lax.conv_general_dilated(
        h, w2, (1, 1), "VALID",
        dimension_numbers=("NCHW", "OIHW", "NCHW"), precision=hp)
    h = jax.nn.relu(h + b2[None, :, None, None])                        # (N,4,1,1)
    h = h.reshape(h.shape[0], -1)                                       # (N,4)
    return jnp.dot(h, wfc.T, precision=hp) + bfc                        # (N,10)


if __name__ == "__main__":
    key = jax.random.PRNGKey(0)
    kx_small, kx_mid, kp = jax.random.split(key, 3)

    params = init_params(kp)
    prepared = prepare_params(params)   # one-time weight repack, outside forward path

    # Tiny batch (single padded block) and a mid-size batch (2 tiles, partial
    # final block, megacore-sharded path) to exercise both code paths.
    for batch, kk in ((2, kx_small), (300, kx_mid)):
        x = jax.random.normal(kk, (batch, 8, 8), jnp.float32)
        y = digits_convnet_forward(x, prepared)
        jax.block_until_ready(y)

        y_ref = digits_convnet_reference(x, params)
        assert y.shape == (batch, 10)
        assert jnp.allclose(y, y_ref, atol=5e-3, rtol=5e-3), f"mismatch at batch={batch}"

    print("KERNEL_OK")
</pallas_src>

<mosaic_0001>
module attributes {stable_mosaic.version = 11 : i64} {
  func.func @_fused_kernel(%arg0: i32, %arg1: memref<8x64xf32, #tpu.memory_space<vmem>>, %arg2: memref<64x512xf32, #tpu.memory_space<vmem>>, %arg3: memref<1x128xf32, #tpu.memory_space<vmem>>, %arg4: memref<128x128xf32, #tpu.memory_space<vmem>>, %arg5: memref<1x128xf32, #tpu.memory_space<vmem>>, %arg6: memref<128x16xf32, #tpu.memory_space<vmem>>, %arg7: memref<1x16xf32, #tpu.memory_space<vmem>>, %arg8: memref<8x16xf32, #tpu.memory_space<vmem>>) attributes {dimension_semantics = [#tpu.dimension_semantics<parallel>], iteration_bounds = array<i64: 1>, scalar_prefetch = 0 : i64, scratch_operands = 0 : i64, tpu.core_type = #tpu.core_type<tc>, window_params = [{transform_indices = @transform_0, window_bounds = array<i64: 8, 64>}, {pipeline_mode = #tpu.pipeline_mode<synchronous>, transform_indices = @transform_1, window_bounds = array<i64: 64, 512>}, {pipeline_mode = #tpu.pipeline_mode<synchronous>, transform_indices = @transform_2, window_bounds = array<i64: 1, 128>}, {pipeline_mode = #tpu.pipeline_mode<synchronous>, transform_indices = @transform_3, window_bounds = array<i64: 128, 128>}, {pipeline_mode = #tpu.pipeline_mode<synchronous>, transform_indices = @transform_4, window_bounds = array<i64: 1, 128>}, {pipeline_mode = #tpu.pipeline_mode<synchronous>, transform_indices = @transform_5, window_bounds = array<i64: 128, 16>}, {pipeline_mode = #tpu.pipeline_mode<synchronous>, transform_indices = @transform_6, window_bounds = array<i64: 1, 16>}, {transform_indices = @transform_7, window_bounds = array<i64: 8, 16>}]} {
    %c0 = arith.constant 0 : index
    %c0_0 = arith.constant 0 : index
    %0 = vector.load %arg1[%c0, %c0_0] : memref<8x64xf32, #tpu.memory_space<vmem>>, vector<8x64xf32>
    %c0_1 = arith.constant 0 : index
    %c0_2 = arith.constant 0 : index
    %1 = vector.load %arg2[%c0_1, %c0_2] : memref<64x512xf32, #tpu.memory_space<vmem>>, vector<64x128xf32>
    %cst = arith.constant dense<0.000000e+00> : vector<8x128xf32>
    %2 = tpu.matmul %0, %1, %cst {dimension_numbers = #tpu.dot_dimension_numbers<[1], [0], [0], [1], [0, 0, 1, 1], [], []>} : vector<8x64xf32>, vector<64x128xf32>, vector<8x128xf32> -> vector<8x128xf32>
    %c0_3 = arith.constant 0 : index
    %c128 = arith.constant 128 : index
    %3 = vector.load %arg2[%c0_3, %c128] : memref<64x512xf32, #tpu.memory_space<vmem>>, vector<64x128xf32>
    %cst_4 = arith.constant dense<0.000000e+00> : vector<8x128xf32>
    %4 = tpu.matmul %0, %3, %cst_4 {dimension_numbers = #tpu.dot_dimension_numbers<[1], [0], [0], [1], [0, 0, 1, 1], [], []>} : vector<8x64xf32>, vector<64x128xf32>, vector<8x128xf32> -> vector<8x128xf32>
    %5 = arith.maximumf %2, %4 : vector<8x128xf32>
    %c0_5 = arith.constant 0 : index
    %c256 = arith.constant 256 : index
    %6 = vector.load %arg2[%c0_5, %c256] : memref<64x512xf32, #tpu.memory_space<vmem>>, vector<64x128xf32>
    %cst_6 = arith.constant dense<0.000000e+00> : vector<8x128xf32>
    %7 = tpu.matmul %0, %6, %cst_6 {dimension_numbers = #tpu.dot_dimension_numbers<[1], [0], [0], [1], [0, 0, 1, 1], [], []>} : vector<8x64xf32>, vector<64x128xf32>, vector<8x128xf32> -> vector<8x128xf32>
    %8 = arith.maximumf %5, %7 : vector<8x128xf32>
    %c0_7 = arith.constant 0 : index
    %c384 = arith.constant 384 : index
    %9 = vector.load %arg2[%c0_7, %c384] : memref<64x512xf32, #tpu.memory_space<vmem>>, vector<64x128xf32>
    %cst_8 = arith.constant dense<0.000000e+00> : vector<8x128xf32>
    %10 = tpu.matmul %0, %9, %cst_8 {dimension_numbers = #tpu.dot_dimension_numbers<[1], [0], [0], [1], [0, 0, 1, 1], [], []>} : vector<8x64xf32>, vector<64x128xf32>, vector<8x128xf32> -> vector<8x128xf32>
    %11 = arith.maximumf %8, %10 : vector<8x128xf32>
    %c0_9 = arith.constant 0 : index
    %c0_10 = arith.constant 0 : index
    %12 = vector.load %arg3[%c0_9, %c0_10] : memref<1x128xf32, #tpu.memory_space<vmem>>, vector<1x128xf32>
    %13 = vector.broadcast %12 : vector<1x128xf32> to vector<8x128xf32>
    %14 = arith.addf %11, %13 : vector<8x128xf32>
    %cst_11 = arith.constant 0.000000e+00 : f32
    %15 = vector.broadcast %cst_11 : f32 to vector<8x128xf32>
    %16 = arith.maximumf %14, %15 : vector<8x128xf32>
    %c0_12 = arith.constant 0 : index
    %c0_13 = arith.constant 0 : index
    %17 = vector.load %arg4[%c0_12, %c0_13] : memref<128x128xf32, #tpu.memory_space<vmem>>, vector<128x128xf32>
    %cst_14 = arith.constant dense<0.000000e+00> : vector<8x128xf32>
    %18 = tpu.matmul %16, %17, %cst_14 {dimension_numbers = #tpu.dot_dimension_numbers<[1], [0], [0], [1], [0, 0, 1, 1], [], []>} : vector<8x128xf32>, vector<128x128xf32>, vector<8x128xf32> -> vector<8x128xf32>
    %c0_15 = arith.constant 0 : index
    %c0_16 = arith.constant 0 : index
    %19 = vector.load %arg5[%c0_15, %c0_16] : memref<1x128xf32, #tpu.memory_space<vmem>>, vector<1x128xf32>
    %20 = vector.broadcast %19 : vector<1x128xf32> to vector<8x128xf32>
    %21 = arith.addf %18, %20 : vector<8x128xf32>
    %cst_17 = arith.constant 0.000000e+00 : f32
    %22 = vector.broadcast %cst_17 : f32 to vector<8x128xf32>
    %23 = arith.maximumf %21, %22 : vector<8x128xf32>
    %c0_18 = arith.constant 0 : index
    %c0_19 = arith.constant 0 : index
    %24 = vector.load %arg6[%c0_18, %c0_19] : memref<128x16xf32, #tpu.memory_space<vmem>>, vector<128x16xf32>
    %cst_20 = arith.constant dense<0.000000e+00> : vector<8x16xf32>
    %25 = tpu.matmul %23, %24, %cst_20 {dimension_numbers = #tpu.dot_dimension_numbers<[1], [0], [0], [1], [0, 0, 1, 1], [], []>} : vector<8x128xf32>, vector<128x16xf32>, vector<8x16xf32> -> vector<8x16xf32>
    %c0_21 = arith.constant 0 : index
    %c0_22 = arith.constant 0 : index
    %26 = vector.load %arg7[%c0_21, %c0_22] : memref<1x16xf32, #tpu.memory_space<vmem>>, vector<1x16xf32>
    %27 = vector.broadcast %26 : vector<1x16xf32> to vector<8x16xf32>
    %28 = arith.addf %25, %27 : vector<8x16xf32>
    %c0_23 = arith.constant 0 : index
    %c0_24 = arith.constant 0 : index
    %29 = vector.load %arg8[%c0_23, %c0_24] : memref<8x16xf32, #tpu.memory_space<vmem>>, vector<8x16xf32>
    tpu.vector_store %arg8[%c0_23, %c0_24], %28 {strides = array<i32>} : memref<8x16xf32, #tpu.memory_space<vmem>>, vector<8x16xf32>,
    return
  }
  func.func @transform_0(%arg0: i32) -> (i32, i32) {
    %c0_i32 = arith.constant 0 : i32
    %c0_i32_0 = arith.constant 0 : i32
    return %arg0, %c0_i32 : i32, i32
  }
  func.func @transform_1(%arg0: i32) -> (i32, i32) {
    %c0_i32 = arith.constant 0 : i32
    %c0_i32_0 = arith.constant 0 : i32
    %c0_i32_1 = arith.constant 0 : i32
    return %c0_i32, %c0_i32_0 : i32, i32
  }
  func.func @transform_2(%arg0: i32) -> (i32, i32) {
    %c0_i32 = arith.constant 0 : i32
    %c0_i32_0 = arith.constant 0 : i32
    %c0_i32_1 = arith.constant 0 : i32
    return %c0_i32, %c0_i32_0 : i32, i32
  }
  func.func @transform_3(%arg0: i32) -> (i32, i32) {
    %c0_i32 = arith.constant 0 : i32
    %c0_i32_0 = arith.constant 0 : i32
    %c0_i32_1 = arith.constant 0 : i32
    return %c0_i32, %c0_i32_0 : i32, i32
  }
  func.func @transform_4(%arg0: i32) -> (i32, i32) {
    %c0_i32 = arith.constant 0 : i32
    %c0_i32_0 = arith.constant 0 : i32
    %c0_i32_1 = arith.constant 0 : i32
    return %c0_i32, %c0_i32_0 : i32, i32
  }
  func.func @transform_5(%arg0: i32) -> (i32, i32) {
    %c0_i32 = arith.constant 0 : i32
    %c0_i32_0 = arith.constant 0 : i32
    %c0_i32_1 = arith.constant 0 : i32
    return %c0_i32, %c0_i32_0 : i32, i32
  }
  func.func @transform_6(%arg0: i32) -> (i32, i32) {
    %c0_i32 = arith.constant 0 : i32
    %c0_i32_0 = arith.constant 0 : i32
    %c0_i32_1 = arith.constant 0 : i32
    return %c0_i32, %c0_i32_0 : i32, i32
  }
  func.func @transform_7(%arg0: i32) -> (i32, i32) {
    %c0_i32 = arith.constant 0 : i32
    %c0_i32_0 = arith.constant 0 : i32
    return %arg0, %c0_i32 : i32, i32
  }
}

</mosaic_0001>

<llo_original>
// kernel: digits_convnet_forward.1
$region0: #{digits_convnet_forward.1}
  #allocation0 [shape = 'u32[]', space=smem, size = 0x4, offset = 0x4, fixed_abs, tag = 'smem constant byte address 0x4 - core index']
  #allocation1 [shape = 'u32[144,128]{1,0:T(1,128)}', space=vmem, size = 0x12000, scoped, tag = 'internal scratch']
  %s0 = inlined_call_operand.vmem [shape: f32[8,64], index: 0, kind: input, shape index: {}]
  %s1 = inlined_call_operand.hbm [shape: f32[64,512], index: 1, kind: input, shape index: {}]
  %s2 = inlined_call_operand.vmem [shape: f32[1,128], index: 2, kind: input, shape index: {}]
  %s3 = inlined_call_operand.vmem [shape: f32[128,128], index: 3, kind: input, shape index: {}]
  %s4 = inlined_call_operand.vmem [shape: f32[1,128], index: 4, kind: input, shape index: {}]
  %s5 = inlined_call_operand.vmem [shape: f32[128,16], index: 5, kind: input, shape index: {}]
  %s6 = inlined_call_operand.vmem [shape: f32[1,16], index: 6, kind: input, shape index: {}]
  %s7 = inlined_call_operand.vmem [shape: f32[8,16], index: 7, kind: output, shape index: {}]
  %s8 = sld [smem:[#allocation0]]
  $region42: #{digits_convnet_forward.1} parent=0
    _
  %s10 = ssub.s32 1, %s8
  %s11 = scalar_select 0, %s10, %s8
  $region1: #{digits_convnet_forward.1} parent=0
    #allocation2 [shape = 'u8[131072]{0}', space=vmem, size = 0x20000, scoped, tag = 'input window, operand 1, single buffered']
    #allocation3 [shape = 's32[1]{0}', space=sflag, size = 0x4, scoped, tag = 'scoped memory for digits_convnet_forward.1']
    %12 = vsyncpa [#allocation3], 0
    // Predicated region
    $region2: #{digits_convnet_forward.1} parent=1 // pred_check
      _
    $region3: #{digits_convnet_forward.1} parent=1 // pred_check_branch
      %14 = sbr.rel (0) target = $region5
    $region4: #{digits_convnet_forward.1} parent=1 // pred_region
      _
    $region5: #{digits_convnet_forward.1} parent=1 // pred_fallthru
      _
    // Predicated region
    $region6: #{digits_convnet_forward.1} parent=1 // pred_check
      _
    $region7: #{digits_convnet_forward.1} parent=1 // pred_check_branch
      %16 = sbr.rel (0) target = $region9
    $region8: #{digits_convnet_forward.1} parent=1 // pred_region
      %s18 = ssub.s32 4096, 4096
      %19 = vsyncadd [#allocation3], %s18
      %s20 = sshll.u32 [#allocation2], 4
      %s21 = int_to_ptr.vmem [resolvable:$true] %s20
      %26 = dma.hbm_to_vmem [thread:$0]  %s1, 4096, %s21, [#allocation3], 512, 512, 32
    $region9: #{digits_convnet_forward.1} parent=1 // pred_fallthru
      _
    // Predicated region
    $region10: #{digits_convnet_forward.1} parent=1 // pred_check
      _
    $region11: #{digits_convnet_forward.1} parent=1 // pred_check_branch
      %28 = sbr.rel (0) target = $region13
    $region12: #{digits_convnet_forward.1} parent=1 // pred_region
      _
    $region13: #{digits_convnet_forward.1} parent=1 // pred_fallthru
      _
    // Predicated region
    $region14: #{digits_convnet_forward.1} parent=1 // pred_check
      _
    $region15: #{digits_convnet_forward.1} parent=1 // pred_check_branch
      %30 = sbr.rel (0) target = $region17
    $region16: #{digits_convnet_forward.1} parent=1 // pred_region
      _
    $region17: #{digits_convnet_forward.1} parent=1 // pred_fallthru
      _
    // Predicated region
    $region18: #{digits_convnet_forward.1} parent=1 // pred_check
      _
    $region19: #{digits_convnet_forward.1} parent=1 // pred_check_branch
      %32 = sbr.rel (0) target = $region21
    $region20: #{digits_convnet_forward.1} parent=1 // pred_region
      _
    $region21: #{digits_convnet_forward.1} parent=1 // pred_fallthru
      _
    // Predicated region
    $region22: #{digits_convnet_forward.1} parent=1 // pred_check
      _
    $region23: #{digits_convnet_forward.1} parent=1 // pred_check_branch
      %34 = sbr.rel (0) target = $region25
    $region24: #{digits_convnet_forward.1} parent=1 // pred_region
      _
    $region25: #{digits_convnet_forward.1} parent=1 // pred_fallthru
      _
    // Predicated region
    $region26: #{digits_convnet_forward.1} parent=1 // pred_check
      _
    $region27: #{digits_convnet_forward.1} parent=1 // pred_check_branch
      %36 = sbr.rel (0) target = $region29
    $region28: #{digits_convnet_forward.1} parent=1 // pred_region
      _
    $region29: #{digits_convnet_forward.1} parent=1 // pred_fallthru
      _
    // Predicated region
    $region30: #{digits_convnet_forward.1} parent=1 // pred_check
      _
    $region31: #{digits_convnet_forward.1} parent=1 // pred_check_branch
      %38 = sbr.rel (0) target = $region33
    $region32: #{digits_convnet_forward.1} parent=1 // pred_region
      %39 = dma.done [#allocation3], 4096
    $region33: #{digits_convnet_forward.1} parent=1 // pred_fallthru
      _
    %v40 = vld [vmem:[%s0] sm:$0xff]
    %v41 = vld [vmem:[#allocation2] sm:$0xff]
    %v42 = vld [vmem:[#allocation2 + $0x20] sm:$0xff]
    %v43 = vld [vmem:[#allocation2 + $0x40] sm:$0xff]
    %v44 = vld [vmem:[#allocation2 + $0x60] sm:$0xff]
    %v45 = vld [vmem:[#allocation2 + $0x80] sm:$0xff]
    %v46 = vld [vmem:[#allocation2 + $0xa0] sm:$0xff]
    %v47 = vld [vmem:[#allocation2 + $0xc0] sm:$0xff]
    %v48 = vld [vmem:[#allocation2 + $0xe0] sm:$0xff]
    %vm49 = vcmask 523264
    %v51 = vsel %vm49, %v40, 0
    %53 = vmatprep.subr.mxu0 0.0
    %54 = vmatpush1.msra.mxu0 %v41
    %55 = vmatprep.subr.mxu0 0.0
    %56 = vmatpush1.msra.mxu0 %v42
    %57 = vmatprep.subr.mxu0 0.0
    %58 = vmatpush1.msra.mxu0 %v43
    %59 = vmatprep.subr.mxu0 0.0
    %60 = vmatpush1.msra.mxu0 %v44
    %61 = vmatprep.subr.mxu0 0.0
    %62 = vmatpush1.msra.mxu0 %v45
    %63 = vmatprep.subr.mxu0 0.0
    %64 = vmatpush1.msra.mxu0 %v46
    %65 = vmatprep.subr.mxu0 0.0
    %66 = vmatpush1.msra.mxu0 %v47
    %67 = vmatprep.subr.mxu0 0.0
    %68 = vmatpush1.msra.mxu0 %v48
    %69 = vmatprep.subr.mxu0 0.0
    %70 = vmatpush1.msra.mxu0 0.0
    %71 = vmatprep.subr.mxu0 0.0
    %72 = vmatpush1.msra.mxu0 0.0
    %73 = vmatprep.subr.mxu0 0.0
    %74 = vmatpush1.msra.mxu0 0.0
    %75 = vmatprep.subr.mxu0 0.0
    %76 = vmatpush1.msra.mxu0 0.0
    %77 = vmatprep.subr.mxu0 0.0
    %78 = vmatpush1.msra.mxu0 0.0
    %79 = vmatprep.subr.mxu0 0.0
    %80 = vmatpush1.msra.mxu0 0.0
    %81 = vmatprep.subr.mxu0 0.0
    %82 = vmatpush1.msra.mxu0 0.0
    %83 = vmatprep.subr.mxu0 0.0
    %84 = vmatpush1.msra.mxu0 0.0
    %85 = vmatprep.subr.mxu0 0.0
    %86 = vmatpush1.msra.mxu0 0.0
    %87 = vmatprep.subr.mxu0 0.0
    %88 = vmatpush1.msra.mxu0 0.0
    %89 = vmatprep.subr.mxu0 0.0
    %90 = vmatpush1.msra.mxu0 0.0
    %91 = vmatprep.subr.mxu0 0.0
    %92 = vmatpush1.msra.mxu0 0.0
    %93 = vmatprep.subr.mxu0 0.0
    %94 = vmatpush1.msra.mxu0 0.0
    %95 = vmatprep.subr.mxu0 0.0
    %96 = vmatpush1.msra.mxu0 0.0
    %97 = vmatprep.subr.mxu0 0.0
    %98 = vmatpush1.msra.mxu0 0.0
    %99 = vmatprep.subr.mxu0 0.0
    %100 = vmatpush1.msra.mxu0 0.0
    %101 = vmatprep.subr.mxu0 0.0
    %102 = vmatpush1.msra.mxu0 0.0
    %103 = vmatprep.subr.mxu0 0.0
    %104 = vmatpush1.msra.mxu0 0.0
    %105 = vmatprep.subr.mxu0 0.0
    %106 = vmatpush1.msra.mxu0 0.0
    %107 = vmatprep.subr.mxu0 0.0
    %108 = vmatpush1.msra.mxu0 0.0
    %109 = vmatprep.subr.mxu0 0.0
    %110 = vmatpush1.msra.mxu0 0.0
    %111 = vmatprep.subr.mxu0 0.0
    %112 = vmatpush1.msra.mxu0 0.0
    %113 = vmatprep.subr.mxu0 0.0
    %114 = vmatpush1.msra.mxu0 0.0
    %115 = vmatprep.subr.mxu0 0.0
    %116 = vmatpush1.msra.mxu0 0.0
    %117 = vmatprep.mubr.f32.mxu0 0.0
    %118 = vmatmul.mubr.f32.gmra.mrb[0].mxu0 %v51
    %v119 = vpop.f32.mrb[0].mxu0
    %v120 = vadd.f32 0.0, %v119
    %v121 = vpop.f32.mrb[0].mxu0
    %122 = vdwg.mxu0
    %v123 = vld [vmem:[#allocation2 + $0x8] sm:$0xff]
    %v124 = vld [vmem:[#allocation2 + $0x28] sm:$0xff]
    %v125 = vld [vmem:[#allocation2 + $0x48] sm:$0xff]
    %v126 = vld [vmem:[#allocation2 + $0x68] sm:$0xff]
    %v127 = vld [vmem:[#allocation2 + $0x88] sm:$0xff]
    %v128 = vld [vmem:[#allocation2 + $0xa8] sm:$0xff]
    %v129 = vld [vmem:[#allocation2 + $0xc8] sm:$0xff]
    %v130 = vld [vmem:[#allocation2 + $0xe8] sm:$0xff]
    %131 = vmatprep.subr.mxu0 0.0
    %132 = vmatpush1.msra.mxu0 %v123
    %133 = vmatprep.subr.mxu0 0.0
    %134 = vmatpush1.msra.mxu0 %v124
    %135 = vmatprep.subr.mxu0 0.0
    %136 = vmatpush1.msra.mxu0 %v125
    %137 = vmatprep.subr.mxu0 0.0
    %138 = vmatpush1.msra.mxu0 %v126
    %139 = vmatprep.subr.mxu0 0.0
    %140 = vmatpush1.msra.mxu0 %v127
    %141 = vmatprep.subr.mxu0 0.0
    %142 = vmatpush1.msra.mxu0 %v128
    %143 = vmatprep.subr.mxu0 0.0
    %144 = vmatpush1.msra.mxu0 %v129
    %145 = vmatprep.subr.mxu0 0.0
    %146 = vmatpush1.msra.mxu0 %v130
    %147 = vmatprep.subr.mxu0 0.0
    %148 = vmatpush1.msra.mxu0 0.0
    %149 = vmatprep.subr.mxu0 0.0
    %150 = vmatpush1.msra.mxu0 0.0
    %151 = vmatprep.subr.mxu0 0.0
    %152 = vmatpush1.msra.mxu0 0.0
    %153 = vmatprep.subr.mxu0 0.0
    %154 = vmatpush1.msra.mxu0 0.0
    %155 = vmatprep.subr.mxu0 0.0
    %156 = vmatpush1.msra.mxu0 0.0
    %157 = vmatprep.subr.mxu0 0.0
    %158 = vmatpush1.msra.mxu0 0.0
    %159 = vmatprep.subr.mxu0 0.0
    %160 = vmatpush1.msra.mxu0 0.0
    %161 = vmatprep.subr.mxu0 0.0
    %162 = vmatpush1.msra.mxu0 0.0
    %163 = vmatprep.subr.mxu0 0.0
    %164 = vmatpush1.msra.mxu0 0.0
    %165 = vmatprep.subr.mxu0 0.0
    %166 = vmatpush1.msra.mxu0 0.0
    %167 = vmatprep.subr.mxu0 0.0
    %168 = vmatpush1.msra.mxu0 0.0
    %169 = vmatprep.subr.mxu0 0.0
    %170 = vmatpush1.msra.mxu0 0.0
    %171 = vmatprep.subr.mxu0 0.0
    %172 = vmatpush1.msra.mxu0 0.0
    %173 = vmatprep.subr.mxu0 0.0
    %174 = vmatpush1.msra.mxu0 0.0
    %175 = vmatprep.subr.mxu0 0.0
    %176 = vmatpush1.msra.mxu0 0.0
    %177 = vmatprep.subr.mxu0 0.0
    %178 = vmatpush1.msra.mxu0 0.0
    %179 = vmatprep.subr.mxu0 0.0
    %180 = vmatpush1.msra.mxu0 0.0
    %181 = vmatprep.subr.mxu0 0.0
    %182 = vmatpush1.msra.mxu0 0.0
    %183 = vmatprep.subr.mxu0 0.0
    %184 = vmatpush1.msra.mxu0 0.0
    %185 = vmatprep.subr.mxu0 0.0
    %186 = vmatpush1.msra.mxu0 0.0
    %187 = vmatprep.subr.mxu0 0.0
    %188 = vmatpush1.msra.mxu0 0.0
    %189 = vmatprep.subr.mxu0 0.0
    %190 = vmatpush1.msra.mxu0 0.0
    %191 = vmatprep.subr.mxu0 0.0
    %192 = vmatpush1.msra.mxu0 0.0
    %193 = vmatprep.subr.mxu0 0.0
    %194 = vmatpush1.msra.mxu0 0.0
    %195 = vmatprep.mubr.f32.mxu0 0.0
    %196 = vmatmul.mubr.f32.gmra.mrb[0].mxu0 %v51
    %v197 = vpop.f32.mrb[0].mxu0
    %v198 = vadd.f32 0.0, %v197
    %v199 = vpop.f32.mrb[0].mxu0
    %200 = vdwg.mxu0
    %v201 = vmax.f32 %v120, %v198
    %v202 = vld [vmem:[#allocation2 + $0x10] sm:$0xff]
    %v203 = vld [vmem:[#allocation2 + $0x30] sm:$0xff]
    %v204 = vld [vmem:[#allocation2 + $0x50] sm:$0xff]
    %v205 = vld [vmem:[#allocation2 + $0x70] sm:$0xff]
    %v206 = vld [vmem:[#allocation2 + $0x90] sm:$0xff]
    %v207 = vld [vmem:[#allocation2 + $0xb0] sm:$0xff]
    %v208 = vld [vmem:[#allocation2 + $0xd0] sm:$0xff]
    %v209 = vld [vmem:[#allocation2 + $0xf0] sm:$0xff]
    %210 = vmatprep.subr.mxu0 0.0
    %211 = vmatpush1.msra.mxu0 %v202
    %212 = vmatprep.subr.mxu0 0.0
    %213 = vmatpush1.msra.mxu0 %v203
    %214 = vmatprep.subr.mxu0 0.0
    %215 = vmatpush1.msra.mxu0 %v204
    %216 = vmatprep.subr.mxu0 0.0
    %217 = vmatpush1.msra.mxu0 %v205
    %218 = vmatprep.subr.mxu0 0.0
    %219 = vmatpush1.msra.mxu0 %v206
    %220 = vmatprep.subr.mxu0 0.0
    %221 = vmatpush1.msra.mxu0 %v207
    %222 = vmatprep.subr.mxu0 0.0
    %223 = vmatpush1.msra.mxu0 %v208
    %224 = vmatprep.subr.mxu0 0.0
    %225 = vmatpush1.msra.mxu0 %v209
    %226 = vmatprep.subr.mxu0 0.0
    %227 = vmatpush1.msra.mxu0 0.0
    %228 = vmatprep.subr.mxu0 0.0
    %229 = vmatpush1.msra.mxu0 0.0
    %230 = vmatprep.subr.mxu0 0.0
    %231 = vmatpush1.msra.mxu0 0.0
    %232 = vmatprep.subr.mxu0 0.0
    %233 = vmatpush1.msra.mxu0 0.0
    %234 = vmatprep.subr.mxu0 0.0
    %235 = vmatpush1.msra.mxu0 0.0
    %236 = vmatprep.subr.mxu0 0.0
    %237 = vmatpush1.msra.mxu0 0.0
    %238 = vmatprep.subr.mxu0 0.0
    %239 = vmatpush1.msra.mxu0 0.0
    %240 = vmatprep.subr.mxu0 0.0
    %241 = vmatpush1.msra.mxu0 0.0
    %242 = vmatprep.subr.mxu0 0.0
    %243 = vmatpush1.msra.mxu0 0.0
    %244 = vmatprep.subr.mxu0 0.0
    %245 = vmatpush1.msra.mxu0 0.0
    %246 = vmatprep.subr.mxu0 0.0
    %247 = vmatpush1.msra.mxu0 0.0
    %248 = vmatprep.subr.mxu0 0.0
    %249 = vmatpush1.msra.mxu0 0.0
    %250 = vmatprep.subr.mxu0 0.0
    %251 = vmatpush1.msra.mxu0 0.0
    %252 = vmatprep.subr.mxu0 0.0
    %253 = vmatpush1.msra.mxu0 0.0
    %254 = vmatprep.subr.mxu0 0.0
    %255 = vmatpush1.msra.mxu0 0.0
    %256 = vmatprep.subr.mxu0 0.0
    %257 = vmatpush1.msra.mxu0 0.0
    %258 = vmatprep.subr.mxu0 0.0
    %259 = vmatpush1.msra.mxu0 0.0
    %260 = vmatprep.subr.mxu0 0.0
    %261 = vmatpush1.msra.mxu0 0.0
    %262 = vmatprep.subr.mxu0 0.0
    %263 = vmatpush1.msra.mxu0 0.0
    %264 = vmatprep.subr.mxu0 0.0
    %265 = vmatpush1.msra.mxu0 0.0
    %266 = vmatprep.subr.mxu0 0.0
    %267 = vmatpush1.msra.mxu0 0.0
    %268 = vmatprep.subr.mxu0 0.0
    %269 = vmatpush1.msra.mxu0 0.0
    %270 = vmatprep.subr.mxu0 0.0
    %271 = vmatpush1.msra.mxu0 0.0
    %272 = vmatprep.subr.mxu0 0.0
    %273 = vmatpush1.msra.mxu0 0.0
    %274 = vmatprep.mubr.f32.mxu0 0.0
    %275 = vmatmul.mubr.f32.gmra.mrb[0].mxu0 %v51
    %v276 = vpop.f32.mrb[0].mxu0
    %v277 = vadd.f32 0.0, %v276
    %v278 = vpop.f32.mrb[0].mxu0
    %279 = vdwg.mxu0
    %v280 = vmax.f32 %v201, %v277
    %v281 = vld [vmem:[#allocation2 + $0x18] sm:$0xff]
    %v282 = vld [vmem:[#allocation2 + $0x38] sm:$0xff]
    %v283 = vld [vmem:[#allocation2 + $0x58] sm:$0xff]
    %v284 = vld [vmem:[#allocation2 + $0x78] sm:$0xff]
    %v285 = vld [vmem:[#allocation2 + $0x98] sm:$0xff]
    %v286 = vld [vmem:[#allocation2 + $0xb8] sm:$0xff]
    %v287 = vld [vmem:[#allocation2 + $0xd8] sm:$0xff]
    %v288 = vld [vmem:[#allocation2 + $0xf8] sm:$0xff]
    %289 = vmatprep.subr.mxu0 0.0
    %290 = vmatpush1.msra.mxu0 %v281
    %291 = vmatprep.subr.mxu0 0.0
    %292 = vmatpush1.msra.mxu0 %v282
    %293 = vmatprep.subr.mxu0 0.0
    %294 = vmatpush1.msra.mxu0 %v283
    %295 = vmatprep.subr.mxu0 0.0
    %296 = vmatpush1.msra.mxu0 %v284
    %297 = vmatprep.subr.mxu0 0.0
    %298 = vmatpush1.msra.mxu0 %v285
    %299 = vmatprep.subr.mxu0 0.0
    %300 = vmatpush1.msra.mxu0 %v286
    %301 = vmatprep.subr.mxu0 0.0
    %302 = vmatpush1.msra.mxu0 %v287
    %303 = vmatprep.subr.mxu0 0.0
    %304 = vmatpush1.msra.mxu0 %v288
    %305 = vmatprep.subr.mxu0 0.0
    %306 = vmatpush1.msra.mxu0 0.0
    %307 = vmatprep.subr.mxu0 0.0
    %308 = vmatpush1.msra.mxu0 0.0
    %309 = vmatprep.subr.mxu0 0.0
    %310 = vmatpush1.msra.mxu0 0.0
    %311 = vmatprep.subr.mxu0 0.0
    %312 = vmatpush1.msra.mxu0 0.0
    %313 = vmatprep.subr.mxu0 0.0
    %314 = vmatpush1.msra.mxu0 0.0
    %315 = vmatprep.subr.mxu0 0.0
    %316 = vmatpush1.msra.mxu0 0.0
    %317 = vmatprep.subr.mxu0 0.0
    %318 = vmatpush1.msra.mxu0 0.0
    %319 = vmatprep.subr.mxu0 0.0
    %320 = vmatpush1.msra.mxu0 0.0
    %321 = vmatprep.subr.mxu0 0.0
    %322 = vmatpush1.msra.mxu0 0.0
    %323 = vmatprep.subr.mxu0 0.0
    %324 = vmatpush1.msra.mxu0 0.0
    %325 = vmatprep.subr.mxu0 0.0
    %326 = vmatpush1.msra.mxu0 0.0
    %327 = vmatprep.subr.mxu0 0.0
    %328 = vmatpush1.msra.mxu0 0.0
    %329 = vmatprep.subr.mxu0 0.0
    %330 = vmatpush1.msra.mxu0 0.0
    %331 = vmatprep.subr.mxu0 0.0
    %332 = vmatpush1.msra.mxu0 0.0
    %333 = vmatprep.subr.mxu0 0.0
    %334 = vmatpush1.msra.mxu0 0.0
    %335 = vmatprep.subr.mxu0 0.0
    %336 = vmatpush1.msra.mxu0 0.0
    %337 = vmatprep.subr.mxu0 0.0
    %338 = vmatpush1.msra.mxu0 0.0
    %339 = vmatprep.subr.mxu0 0.0
    %340 = vmatpush1.msra.mxu0 0.0
    %341 = vmatprep.subr.mxu0 0.0
    %342 = vmatpush1.msra.mxu0 0.0
    %343 = vmatprep.subr.mxu0 0.0
    %344 = vmatpush1.msra.mxu0 0.0
    %345 = vmatprep.subr.mxu0 0.0
    %346 = vmatpush1.msra.mxu0 0.0
    %347 = vmatprep.subr.mxu0 0.0
    %348 = vmatpush1.msra.mxu0 0.0
    %349 = vmatprep.subr.mxu0 0.0
    %350 = vmatpush1.msra.mxu0 0.0
    %351 = vmatprep.subr.mxu0 0.0
    %352 = vmatpush1.msra.mxu0 0.0
    %353 = vmatprep.mubr.f32.mxu0 0.0
    %354 = vmatmul.mubr.f32.gmra.mrb[0].mxu0 %v51
    %v355 = vpop.f32.mrb[0].mxu0
    %v356 = vadd.f32 0.0, %v355
    %v357 = vpop.f32.mrb[0].mxu0
    %358 = vdwg.mxu0
    %v359 = vmax.f32 %v280, %v356
    %v360 = vld [vmem:[%s2] sm:$0x1]
    %v362 = vlaneseq
    %v363 = vshrl.u32 %v362, 7
    %v364 = vsub.s32 0, %v363
    %v365 = vrot.slane %v360, %v364
    %v367 = vadd.f32 %v359, %v365
    %v368 = vmax.f32 %v367, 0.0
    %v369 = vld [vmem:[%s3] sm:$0xff]
    %v370 = vld [vmem:[%s3 + $0x8] sm:$0xff]
    %v371 = vld [vmem:[%s3 + $0x10] sm:$0xff]
    %v372 = vld [vmem:[%s3 + $0x18] sm:$0xff]
    %v373 = vld [vmem:[%s3 + $0x20] sm:$0xff]
    %v374 = vld [vmem:[%s3 + $0x28] sm:$0xff]
    %v375 = vld [vmem:[%s3 + $0x30] sm:$0xff]
    %v376 = vld [vmem:[%s3 + $0x38] sm:$0xff]
    %v377 = vld [vmem:[%s3 + $0x40] sm:$0xff]
    %v378 = vld [vmem:[%s3 + $0x48] sm:$0xff]
    %v379 = vld [vmem:[%s3 + $0x50] sm:$0xff]
    %v380 = vld [vmem:[%s3 + $0x58] sm:$0xff]
    %v381 = vld [vmem:[%s3 + $0x60] sm:$0xff]
    %v382 = vld [vmem:[%s3 + $0x68] sm:$0xff]
    %v383 = vld [vmem:[%s3 + $0x70] sm:$0xff]
    %v384 = vld [vmem:[%s3 + $0x78] sm:$0xff]
    %v385 = vld [vmem:[%s4] sm:$0x1]
    %v387 = vlaneseq
    %v388 = vshrl.u32 %v387, 7
    %v389 = vsub.s32 0, %v388
    %v390 = vrot.slane %v385, %v389
    %392 = vmatprep.subr.mxu0 0.0
    %393 = vmatpush1.msra.mxu0 %v369
    %394 = vmatprep.subr.mxu0 0.0
    %395 = vmatpush1.msra.mxu0 %v370
    %396 = vmatprep.subr.mxu0 0.0
    %397 = vmatpush1.msra.mxu0 %v371
    %398 = vmatprep.subr.mxu0 0.0
    %399 = vmatpush1.msra.mxu0 %v372
    %400 = vmatprep.subr.mxu0 0.0
    %401 = vmatpush1.msra.mxu0 %v373
    %402 = vmatprep.subr.mxu0 0.0
    %403 = vmatpush1.msra.mxu0 %v374
    %404 = vmatprep.subr.mxu0 0.0
    %405 = vmatpush1.msra.mxu0 %v375
    %406 = vmatprep.subr.mxu0 0.0
    %407 = vmatpush1.msra.mxu0 %v376
    %408 = vmatprep.subr.mxu0 0.0
    %409 = vmatpush1.msra.mxu0 %v377
    %410 = vmatprep.subr.mxu0 0.0
    %411 = vmatpush1.msra.mxu0 %v378
    %412 = vmatprep.subr.mxu0 0.0
    %413 = vmatpush1.msra.mxu0 %v379
    %414 = vmatprep.subr.mxu0 0.0
    %415 = vmatpush1.msra.mxu0 %v380
    %416 = vmatprep.subr.mxu0 0.0
    %417 = vmatpush1.msra.mxu0 %v381
    %418 = vmatprep.subr.mxu0 0.0
    %419 = vmatpush1.msra.mxu0 %v382
    %420 = vmatprep.subr.mxu0 0.0
    %421 = vmatpush1.msra.mxu0 %v383
    %422 = vmatprep.subr.mxu0 0.0
    %423 = vmatpush1.msra.mxu0 %v384
    %424 = vmatprep.subr.mxu0 0.0
    %425 = vmatpush1.msra.mxu0 0.0
    %426 = vmatprep.subr.mxu0 0.0
    %427 = vmatpush1.msra.mxu0 0.0
    %428 = vmatprep.subr.mxu0 0.0
    %429 = vmatpush1.msra.mxu0 0.0
    %430 = vmatprep.subr.mxu0 0.0
    %431 = vmatpush1.msra.mxu0 0.0
    %432 = vmatprep.subr.mxu0 0.0
    %433 = vmatpush1.msra.mxu0 0.0
    %434 = vmatprep.subr.mxu0 0.0
    %435 = vmatpush1.msra.mxu0 0.0
    %436 = vmatprep.subr.mxu0 0.0
    %437 = vmatpush1.msra.mxu0 0.0
    %438 = vmatprep.subr.mxu0 0.0
    %439 = vmatpush1.msra.mxu0 0.0
    %440 = vmatprep.subr.mxu0 0.0
    %441 = vmatpush1.msra.mxu0 0.0
    %442 = vmatprep.subr.mxu0 0.0
    %443 = vmatpush1.msra.mxu0 0.0
    %444 = vmatprep.subr.mxu0 0.0
    %445 = vmatpush1.msra.mxu0 0.0
    %446 = vmatprep.subr.mxu0 0.0
    %447 = vmatpush1.msra.mxu0 0.0
    %448 = vmatprep.subr.mxu0 0.0
    %449 = vmatpush1.msra.mxu0 0.0
    %450 = vmatprep.subr.mxu0 0.0
    %451 = vmatpush1.msra.mxu0 0.0
    %452 = vmatprep.subr.mxu0 0.0
    %453 = vmatpush1.msra.mxu0 0.0
    %454 = vmatprep.subr.mxu0 0.0
    %455 = vmatpush1.msra.mxu0 0.0
    %456 = vmatprep.mubr.f32.mxu0 0.0
    %457 = vmatmul.mubr.f32.gmra.mrb[0].mxu0 %v368
    %v458 = vpop.f32.mrb[0].mxu0
    %v459 = vadd.f32 %v390, %v458
    %v460 = vpop.f32.mrb[0].mxu0
    %461 = vdwg.mxu0
    %v462 = vmax.f32 %v459, 0.0
    %v463 = vld [vmem:[%s5] sm:$0xff]
    %v464 = vld [vmem:[%s5 + $0x8] sm:$0xff]
    %v465 = vld [vmem:[%s5 + $0x10] sm:$0xff]
    %v466 = vld [vmem:[%s5 + $0x18] sm:$0xff]
    %v467 = vld [vmem:[%s5 + $0x20] sm:$0xff]
    %v468 = vld [vmem:[%s5 + $0x28] sm:$0xff]
    %v469 = vld [vmem:[%s5 + $0x30] sm:$0xff]
    %v470 = vld [vmem:[%s5 + $0x38] sm:$0xff]
    %v471 = vld [vmem:[%s5 + $0x40] sm:$0xff]
    %v472 = vld [vmem:[%s5 + $0x48] sm:$0xff]
    %v473 = vld [vmem:[%s5 + $0x50] sm:$0xff]
    %v474 = vld [vmem:[%s5 + $0x58] sm:$0xff]
    %v475 = vld [vmem:[%s5 + $0x60] sm:$0xff]
    %v476 = vld [vmem:[%s5 + $0x68] sm:$0xff]
    %v477 = vld [vmem:[%s5 + $0x70] sm:$0xff]
    %v478 = vld [vmem:[%s5 + $0x78] sm:$0xff]
    %v479 = vld [vmem:[%s6] sm:$0x1]
    %v481 = vlaneseq
    %v482 = vshrl.u32 %v481, 7
    %v483 = vsub.s32 0, %v482
    %v484 = vrot.slane %v479, %v483
    %486 = vmatprep.subr.mxu0 0.0
    %487 = vmatpush1.msra.mxu0 %v463
    %488 = vmatprep.subr.mxu0 0.0
    %489 = vmatpush1.msra.mxu0 %v464
    %490 = vmatprep.subr.mxu0 0.0
    %491 = vmatpush1.msra.mxu0 %v465
    %492 = vmatprep.subr.mxu0 0.0
    %493 = vmatpush1.msra.mxu0 %v466
    %494 = vmatprep.subr.mxu0 0.0
    %495 = vmatpush1.msra.mxu0 %v467
    %496 = vmatprep.subr.mxu0 0.0
    %497 = vmatpush1.msra.mxu0 %v468
    %498 = vmatprep.subr.mxu0 0.0
    %499 = vmatpush1.msra.mxu0 %v469
    %500 = vmatprep.subr.mxu0 0.0
    %501 = vmatpush1.msra.mxu0 %v470
    %502 = vmatprep.subr.mxu0 0.0
    %503 = vmatpush1.msra.mxu0 %v471
    %504 = vmatprep.subr.mxu0 0.0
    %505 = vmatpush1.msra.mxu0 %v472
    %506 = vmatprep.subr.mxu0 0.0
    %507 = vmatpush1.msra.mxu0 %v473
    %508 = vmatprep.subr.mxu0 0.0
    %509 = vmatpush1.msra.mxu0 %v474
    %510 = vmatprep.subr.mxu0 0.0
    %511 = vmatpush1.msra.mxu0 %v475
    %512 = vmatprep.subr.mxu0 0.0
    %513 = vmatpush1.msra.mxu0 %v476
    %514 = vmatprep.subr.mxu0 0.0
    %515 = vmatpush1.msra.mxu0 %v477
    %516 = vmatprep.subr.mxu0 0.0
    %517 = vmatpush1.msra.mxu0 %v478
    %518 = vmatprep.subr.mxu0 0.0
    %519 = vmatpush1.msra.mxu0 0.0
    %520 = vmatprep.subr.mxu0 0.0
    %521 = vmatpush1.msra.mxu0 0.0
    %522 = vmatprep.subr.mxu0 0.0
    %523 = vmatpush1.msra.mxu0 0.0
    %524 = vmatprep.subr.mxu0 0.0
    %525 = vmatpush1.msra.mxu0 0.0
    %526 = vmatprep.subr.mxu0 0.0
    %527 = vmatpush1.msra.mxu0 0.0
    %528 = vmatprep.subr.mxu0 0.0
    %529 = vmatpush1.msra.mxu0 0.0
    %530 = vmatprep.subr.mxu0 0.0
    %531 = vmatpush1.msra.mxu0 0.0
    %532 = vmatprep.subr.mxu0 0.0
    %533 = vmatpush1.msra.mxu0 0.0
    %534 = vmatprep.subr.mxu0 0.0
    %535 = vmatpush1.msra.mxu0 0.0
    %536 = vmatprep.subr.mxu0 0.0
    %537 = vmatpush1.msra.mxu0 0.0
    %538 = vmatprep.subr.mxu0 0.0
    %539 = vmatpush1.msra.mxu0 0.0
    %540 = vmatprep.subr.mxu0 0.0
    %541 = vmatpush1.msra.mxu0 0.0
    %542 = vmatprep.subr.mxu0 0.0
    %543 = vmatpush1.msra.mxu0 0.0
    %544 = vmatprep.subr.mxu0 0.0
    %545 = vmatpush1.msra.mxu0 0.0
    %546 = vmatprep.subr.mxu0 0.0
    %547 = vmatpush1.msra.mxu0 0.0
    %548 = vmatprep.subr.mxu0 0.0
    %549 = vmatpush1.msra.mxu0 0.0
    %550 = vmatprep.mubr.f32.mxu0 0.0
    %551 = vmatmul.mubr.f32.gmra.mrb[0].mxu0 %v462
    %v552 = vpop.f32.mrb[0].mxu0
    %v553 = vadd.f32 %v484, %v552
    %v554 = vpop.f32.mrb[0].mxu0
    %555 = vdwg.mxu0
    %vm556 = vcmask 130048
    %557 = vst.msk [vmem:[%s7] sm:$0xff] %vm556, %v553
    // Predicated region
    $region34: #{digits_convnet_forward.1} parent=1 // pred_check
      _
    $region35: #{digits_convnet_forward.1} parent=1 // pred_check_branch
      %559 = sbr.rel (0) target = $region37
    $region36: #{digits_convnet_forward.1} parent=1 // pred_region
      _
    $region37: #{digits_convnet_forward.1} parent=1 // pred_fallthru
      _
    // Predicated region
    $region38: #{digits_convnet_forward.1} parent=1 // pred_check
      _
    $region39: #{digits_convnet_forward.1} parent=1 // pred_check_branch
      %561 = sbr.rel (0) target = $region41
    $region40: #{digits_convnet_forward.1} parent=1 // pred_region
      _
    $region41: #{digits_convnet_forward.1} parent=1 // pred_fallthru
      _
    %562 = vsyncpa [#allocation3], 1

</llo_original>
